<compile_context>
chip_gen: v6e
topology: v6e:2x2x1
jax: 0.10.0
libtpu: 0.0.40
codegen_flags: <defaults>
</compile_context>

<pallas_src>
import numpy as np
import jax
import jax.numpy as jnp
from jax.experimental import pallas as pl
from jax.experimental.pallas import tpu as pltpu

# ------------------------- "Config" (small, synthetic) -------------------------
SAMPLING_RATE = 1000
WIN_TIME = 0.032            # -> win_length = 32
STRIDE_TIME = 0.016         # -> hop_length = 16
N_FFT = 64
N_MELS = 16
NOISE_SCALE = 1e-4

WIN_LENGTH = int(SAMPLING_RATE * WIN_TIME)      # 32
HOP_LENGTH = int(SAMPLING_RATE * STRIDE_TIME)   # 16
N_FREQS = N_FFT // 2 + 1                        # 33 (one-sided spectrum)

PAD_K = 128                 # padded 2*N_FREQS (66 -> 128) : aligned MXU K / lanes
PAD_N = 128                 # padded N_MELS   (16 -> 128) : lane-dense output
MAX_ROWS_PER_BLOCK = 2048   # ~1 MiB double-buffered f32 frames tile at scale


# ------------------------- deterministic parameter setup -----------------------
def _hz_to_mel(f):
    return 2595.0 * np.log10(1.0 + f / 700.0)


def _mel_to_hz(m):
    return 700.0 * (10.0 ** (m / 2595.0) - 1.0)


def melscale_fbanks(n_freqs, f_min, f_max, n_mels, sample_rate):
    # torchaudio.functional.melscale_fbanks, mel_scale="htk", norm=None
    all_freqs = np.linspace(0.0, sample_rate // 2, n_freqs)
    m_min, m_max = _hz_to_mel(f_min), _hz_to_mel(f_max)
    m_pts = np.linspace(m_min, m_max, n_mels + 2)
    f_pts = _mel_to_hz(m_pts)
    f_diff = f_pts[1:] - f_pts[:-1]
    slopes = f_pts[None, :] - all_freqs[:, None]        # (n_freqs, n_mels + 2)
    down = -slopes[:, :-2] / f_diff[:-1]
    up = slopes[:, 2:] / f_diff[1:]
    fb = np.maximum(0.0, np.minimum(down, up))
    return fb.astype(np.float32)                        # (n_freqs, n_mels)


def hann_window_padded(win_length, n_fft):
    # torch.hann_window(win_length, periodic=True), zero-padded (centered) to n_fft
    n = np.arange(win_length)
    w = 0.5 * (1.0 - np.cos(2.0 * np.pi * n / win_length))
    pad_l = (n_fft - win_length) // 2
    pad_r = n_fft - win_length - pad_l
    return np.pad(w, (pad_l, pad_r)).astype(np.float32)          # (n_fft,)


def build_constants():
    """Window folded into the DFT; cos|(-sin) fused; fb stacked; both padded to
    128-lane alignment with zeros (identical math, aligned layout)."""
    win = hann_window_padded(WIN_LENGTH, N_FFT)                  # (N_FFT,)
    n = np.arange(N_FFT)[:, None]
    k = np.arange(N_FREQS)[None, :]
    ang = 2.0 * np.pi * n * k / N_FFT
    cos = np.cos(ang)
    nsin = -np.sin(ang)
    # Windowed [cos | -sin] : one MXU pass produces re and im side by side.
    w_dft = np.concatenate([cos, nsin], axis=1) * win[:, None]   # (N_FFT, 2*N_FREQS)
    w_dft_pad = np.zeros((N_FFT, PAD_K), dtype=np.float32)
    w_dft_pad[:, : 2 * N_FREQS] = w_dft

    # power @ fb == (spec*spec) @ [fb; fb]  (re^2 and im^2 halves share fb).
    # Zero-pad rows to PAD_K (matches padded spec columns) and columns to
    # PAD_N so the kernel's output is a full 128-lane slab (unmasked stores).
    fb = melscale_fbanks(N_FREQS, 0.0, SAMPLING_RATE / 2.0, N_MELS, SAMPLING_RATE)
    fb2_pad = np.zeros((PAD_K, PAD_N), dtype=np.float32)
    fb2_pad[:N_FREQS, :N_MELS] = fb
    fb2_pad[N_FREQS: 2 * N_FREQS, :N_MELS] = fb
    return w_dft_pad.astype(np.float32), fb2_pad.astype(np.float32)


_W_DFT, _FB2 = build_constants()   # (64, 128), (128, 128)


# ------------------------------- Pallas kernel ----------------------------------
def wav_to_mel_kernel(frames_ref, w_ref, fb2_ref, out_ref):
    # frames_ref: (rows_blk, N_FFT)   windowing folded into w_ref
    # w_ref:      (N_FFT, PAD_K)      [win*cos | -win*sin | 0-pad]
    # fb2_ref:    (PAD_K, PAD_N)      [fb; fb; 0-pad]  with 0-padded mel columns
    # out_ref:    (rows_blk, PAD_N)   lane-dense (128) output slab
    spec = jnp.dot(frames_ref[...], w_ref[...],
                   preferred_element_type=jnp.float32)           # (rows, PAD_K)
    sq = spec * spec                                             # re^2 | im^2 | 0
    mel = jnp.dot(sq, fb2_ref[...],
                  preferred_element_type=jnp.float32)            # (rows, PAD_N)
    out_ref[...] = jnp.log2(mel)                                 # padded cols -> -inf


def _call_kernel(frames_2d, rows_per_block, num_blocks):
    rows = frames_2d.shape[0]
    return pl.pallas_call(
        wav_to_mel_kernel,
        out_shape=jax.ShapeDtypeStruct((rows, PAD_N), jnp.float32),
        grid_spec=pltpu.PrefetchScalarGridSpec(
            num_scalar_prefetch=0,
            grid=(num_blocks,),
            in_specs=[
                pl.BlockSpec((rows_per_block, N_FFT), lambda i: (i, 0)),
                pl.BlockSpec((N_FFT, PAD_K), lambda i: (0, 0)),
                pl.BlockSpec((PAD_K, PAD_N), lambda i: (0, 0)),
            ],
            out_specs=pl.BlockSpec((rows_per_block, PAD_N), lambda i: (i, 0)),
        ),
        compiler_params=pltpu.CompilerParams(
            dimension_semantics=("parallel",)),
    )(frames_2d, jnp.asarray(_W_DFT), jnp.asarray(_FB2))


# ------------------------------- wrapper (glue) ---------------------------------
@jax.jit
def wav_to_mel(inputs, input_lengths, key):
    """inputs: (B, T) float32, input_lengths: (B,) int32.
    Returns (log_mel: (B, F, N_MELS) float32, out_lengths: (B,) float32)."""
    B, T = inputs.shape
    pad = N_FFT // 2
    assert T > pad, "reflect padding requires T > n_fft // 2"

    # inputs += noise  (torch.randn * noise_scale)
    noise = jax.random.normal(key, inputs.shape, dtype=inputs.dtype) * NOISE_SCALE
    x = inputs + noise

    # STFT framing, center=True, pad_mode="reflect" (torch.stft semantics)
    xp = jnp.pad(x, ((0, 0), (pad, pad)), mode="reflect")
    n_frames = T // HOP_LENGTH + 1
    idx = (jnp.arange(n_frames)[:, None] * HOP_LENGTH
           + jnp.arange(N_FFT)[None, :])                         # (F, N_FFT)
    frames = xp[:, idx].reshape(B * n_frames, N_FFT)             # (B*F, N_FFT)

    # Flatten batch*frames into one sublane-aligned slab.  Single grid step
    # at small sizes (1 TC on v5e/v6e; per-step overhead dominates any v7x
    # megacore split); only tile the row axis once blocks would exceed
    # MAX_ROWS_PER_BLOCK rows (~1 MiB f32 frames, double-buffered).
    total_rows = B * n_frames
    rows_padded8 = ((total_rows + 7) // 8) * 8
    if rows_padded8 <= MAX_ROWS_PER_BLOCK:
        rows_per_block = rows_padded8
        num_blocks = 1
    else:
        rows_per_block = MAX_ROWS_PER_BLOCK
        num_blocks = (rows_padded8 + MAX_ROWS_PER_BLOCK - 1) // MAX_ROWS_PER_BLOCK
    rows_total = rows_per_block * num_blocks
    frames_padded = jnp.pad(frames, ((0, rows_total - total_rows), (0, 0)))

    log_mel_flat = _call_kernel(frames_padded, rows_per_block, num_blocks)
    # Slice off the zero-padded rows (log2(0) = -inf) AND the zero-padded mel
    # lane columns before reshaping.
    log_mel = log_mel_flat[:total_rows, :N_MELS].reshape(B, n_frames, N_MELS)

    # input_lengths // (T / n_frames) -- PyTorch int_tensor // float -> float tensor
    out_lengths = jnp.floor(
        input_lengths.astype(jnp.float32) / (T / n_frames))
    return log_mel, out_lengths


# ------------------------------------ main ---------------------------------------
if __name__ == "__main__":
    key = jax.random.PRNGKey(0)
    k_in, k_noise = jax.random.split(key)

    B, T = 2, 256
    inputs = jax.random.normal(k_in, (B, T), dtype=jnp.float32)
    input_lengths = jnp.array([256, 200], dtype=jnp.int32)

    log_mel, out_lengths = wav_to_mel(inputs, input_lengths, k_noise)
    jax.block_until_ready((log_mel, out_lengths))

    expected_frames = T // HOP_LENGTH + 1
    assert log_mel.shape == (B, expected_frames, N_MELS), log_mel.shape
    assert out_lengths.shape == (B,), out_lengths.shape
    assert bool(jnp.all(jnp.isfinite(log_mel))), "non-finite mel output"

    print("KERNEL_OK")
</pallas_src>

<mosaic_0001>
module attributes {stable_mosaic.version = 11 : i64} {
  func.func @wav_to_mel_kernel(%arg0: i32, %arg1: memref<40x64xf32, #tpu.memory_space<vmem>>, %arg2: memref<64x128xf32, #tpu.memory_space<vmem>>, %arg3: memref<128x128xf32, #tpu.memory_space<vmem>>, %arg4: memref<40x128xf32, #tpu.memory_space<vmem>>) attributes {dimension_semantics = [#tpu.dimension_semantics<parallel>], iteration_bounds = array<i64: 1>, scalar_prefetch = 0 : i64, scratch_operands = 0 : i64, tpu.core_type = #tpu.core_type<tc>, window_params = [{transform_indices = @transform_0, window_bounds = array<i64: 40, 64>}, {pipeline_mode = #tpu.pipeline_mode<synchronous>, transform_indices = @transform_1, window_bounds = array<i64: 64, 128>}, {pipeline_mode = #tpu.pipeline_mode<synchronous>, transform_indices = @transform_2, window_bounds = array<i64: 128, 128>}, {transform_indices = @transform_3, window_bounds = array<i64: 40, 128>}]} {
    %c0 = arith.constant 0 : index
    %c0_0 = arith.constant 0 : index
    %0 = vector.load %arg1[%c0, %c0_0] : memref<40x64xf32, #tpu.memory_space<vmem>>, vector<40x64xf32>
    %c0_1 = arith.constant 0 : index
    %c0_2 = arith.constant 0 : index
    %1 = vector.load %arg2[%c0_1, %c0_2] : memref<64x128xf32, #tpu.memory_space<vmem>>, vector<64x128xf32>
    %cst = arith.constant dense<0.000000e+00> : vector<40x128xf32>
    %2 = tpu.matmul %0, %1, %cst {dimension_numbers = #tpu.dot_dimension_numbers<[1], [0], [0], [1], [0, 0, 1, 1], [], []>} : vector<40x64xf32>, vector<64x128xf32>, vector<40x128xf32> -> vector<40x128xf32>
    %3 = arith.mulf %2, %2 : vector<40x128xf32>
    %c0_3 = arith.constant 0 : index
    %c0_4 = arith.constant 0 : index
    %4 = vector.load %arg3[%c0_3, %c0_4] : memref<128x128xf32, #tpu.memory_space<vmem>>, vector<128x128xf32>
    %cst_5 = arith.constant dense<0.000000e+00> : vector<40x128xf32>
    %5 = tpu.matmul %3, %4, %cst_5 {dimension_numbers = #tpu.dot_dimension_numbers<[1], [0], [0], [1], [0, 0, 1, 1], [], []>} : vector<40x128xf32>, vector<128x128xf32>, vector<40x128xf32> -> vector<40x128xf32>
    %6 = math.log %5 : vector<40x128xf32>
    %cst_6 = arith.constant 2.000000e+00 : f32
    %7 = math.log %cst_6 : f32
    %8 = vector.broadcast %7 : f32 to vector<40x128xf32>
    %9 = arith.divf %6, %8 : vector<40x128xf32>
    %c0_7 = arith.constant 0 : index
    %c0_8 = arith.constant 0 : index
    %10 = vector.load %arg4[%c0_7, %c0_8] : memref<40x128xf32, #tpu.memory_space<vmem>>, vector<40x128xf32>
    tpu.vector_store %arg4[%c0_7, %c0_8], %9 {strides = array<i32>} : memref<40x128xf32, #tpu.memory_space<vmem>>, vector<40x128xf32>,
    return
  }
  func.func @transform_0(%arg0: i32) -> (i32, i32) {
    %c0_i32 = arith.constant 0 : i32
    %c0_i32_0 = arith.constant 0 : i32
    return %arg0, %c0_i32 : i32, i32
  }
  func.func @transform_1(%arg0: i32) -> (i32, i32) {
    %c0_i32 = arith.constant 0 : i32
    %c0_i32_0 = arith.constant 0 : i32
    %c0_i32_1 = arith.constant 0 : i32
    return %c0_i32, %c0_i32_0 : i32, i32
  }
  func.func @transform_2(%arg0: i32) -> (i32, i32) {
    %c0_i32 = arith.constant 0 : i32
    %c0_i32_0 = arith.constant 0 : i32
    %c0_i32_1 = arith.constant 0 : i32
    return %c0_i32, %c0_i32_0 : i32, i32
  }
  func.func @transform_3(%arg0: i32) -> (i32, i32) {
    %c0_i32 = arith.constant 0 : i32
    %c0_i32_0 = arith.constant 0 : i32
    return %arg0, %c0_i32 : i32, i32
  }
}

</mosaic_0001>

<llo_original>
// kernel: wav_to_mel.1
$region0: #{wav_to_mel.1}
  #allocation0 [shape = 'u32[]', space=smem, size = 0x4, offset = 0x4, fixed_abs, tag = 'smem constant byte address 0x4 - core index']
  #allocation1 [shape = 'u32[144,128]{1,0:T(1,128)}', space=vmem, size = 0x12000, scoped, tag = 'internal scratch']
  %s0 = inlined_call_operand.vmem [shape: f32[40,64], index: 0, kind: input, shape index: {}]
  %s1 = inlined_call_operand.vmem [shape: f32[64,128], index: 1, kind: input, shape index: {}]
  %s2 = inlined_call_operand.vmem [shape: f32[128,128], index: 2, kind: input, shape index: {}]
  %s3 = inlined_call_operand.vmem [shape: f32[40,128], index: 3, kind: output, shape index: {}]
  %s4 = sld [smem:[#allocation0]]
  $region22: #{wav_to_mel.1} parent=0
    _
  %s6 = ssub.s32 1, %s4
  %s7 = scalar_select 0, %s6, %s4
  // Predicated region
  $region2: #{wav_to_mel.1} parent=0 // pred_check
    _
  $region3: #{wav_to_mel.1} parent=0 // pred_check_branch
    %9 = sbr.rel (0) target = $region5
  $region4: #{wav_to_mel.1} parent=0 // pred_region
    _
  $region5: #{wav_to_mel.1} parent=0 // pred_fallthru
    _
  // Predicated region
  $region6: #{wav_to_mel.1} parent=0 // pred_check
    _
  $region7: #{wav_to_mel.1} parent=0 // pred_check_branch
    %11 = sbr.rel (0) target = $region9
  $region8: #{wav_to_mel.1} parent=0 // pred_region
    _
  $region9: #{wav_to_mel.1} parent=0 // pred_fallthru
    _
  // Predicated region
  $region10: #{wav_to_mel.1} parent=0 // pred_check
    _
  $region11: #{wav_to_mel.1} parent=0 // pred_check_branch
    %13 = sbr.rel (0) target = $region13
  $region12: #{wav_to_mel.1} parent=0 // pred_region
    _
  $region13: #{wav_to_mel.1} parent=0 // pred_fallthru
    _
  %v14 = vld [vmem:[%s0] sm:$0xff]
  %v15 = vld [vmem:[%s0 + $0x8] sm:$0xff]
  %v16 = vld [vmem:[%s0 + $0x10] sm:$0xff]
  %v17 = vld [vmem:[%s0 + $0x18] sm:$0xff]
  %v18 = vld [vmem:[%s0 + $0x20] sm:$0xff]
  %v19 = vld [vmem:[%s1] sm:$0xff]
  %v20 = vld [vmem:[%s1 + $0x8] sm:$0xff]
  %v21 = vld [vmem:[%s1 + $0x10] sm:$0xff]
  %v22 = vld [vmem:[%s1 + $0x18] sm:$0xff]
  %v23 = vld [vmem:[%s1 + $0x20] sm:$0xff]
  %v24 = vld [vmem:[%s1 + $0x28] sm:$0xff]
  %v25 = vld [vmem:[%s1 + $0x30] sm:$0xff]
  %v26 = vld [vmem:[%s1 + $0x38] sm:$0xff]
  %vm27 = vcmask 523264
  %v29 = vsel %vm27, %v14, 0
  %v32 = vsel %vm27, %v15, 0
  %v35 = vsel %vm27, %v16, 0
  %v38 = vsel %vm27, %v17, 0
  %v41 = vsel %vm27, %v18, 0
  %43 = vmatprep.subr.mxu0 0.0
  %44 = vmatpush1.msra.mxu0 0.0
  %45 = vmatprep.subr.mxu0 0.0
  %46 = vmatpush1.msra.mxu0 0.0
  %47 = vmatprep.subr.mxu0 0.0
  %48 = vmatpush1.msra.mxu0 0.0
  %49 = vmatprep.subr.mxu0 0.0
  %50 = vmatpush1.msra.mxu0 0.0
  %51 = vmatprep.subr.mxu0 0.0
  %52 = vmatpush1.msra.mxu0 0.0
  %53 = vmatprep.subr.mxu0 0.0
  %54 = vmatpush1.msra.mxu0 0.0
  %55 = vmatprep.subr.mxu0 0.0
  %56 = vmatpush1.msra.mxu0 0.0
  %57 = vmatprep.subr.mxu0 0.0
  %58 = vmatpush1.msra.mxu0 0.0
  %59 = vmatprep.subr.mxu0 0.0
  %60 = vmatpush1.msra.mxu0 %v26
  %61 = vmatprep.subr.mxu0 0.0
  %62 = vmatpush1.msra.mxu0 %v25
  %63 = vmatprep.subr.mxu0 0.0
  %64 = vmatpush1.msra.mxu0 %v24
  %65 = vmatprep.subr.mxu0 0.0
  %66 = vmatpush1.msra.mxu0 %v23
  %67 = vmatprep.subr.mxu0 0.0
  %68 = vmatpush1.msra.mxu0 %v22
  %69 = vmatprep.subr.mxu0 0.0
  %70 = vmatpush1.msra.mxu0 %v21
  %71 = vmatprep.subr.mxu0 0.0
  %72 = vmatpush1.msra.mxu0 %v20
  %73 = vmatprep.subr.mxu0 0.0
  %74 = vmatpush1.msra.mxu0 %v19
  %75 = vmatprep.subr.mxu0 0.0
  %76 = vmatpush2.msra.mxu0 0.0
  %77 = vmatprep.subr.mxu0 0.0
  %78 = vmatpush2.msra.mxu0 0.0
  %79 = vmatprep.subr.mxu0 0.0
  %80 = vmatpush2.msra.mxu0 0.0
  %81 = vmatprep.subr.mxu0 0.0
  %82 = vmatpush2.msra.mxu0 0.0
  %83 = vmatprep.subr.mxu0 0.0
  %84 = vmatpush2.msra.mxu0 0.0
  %85 = vmatprep.subr.mxu0 0.0
  %86 = vmatpush2.msra.mxu0 0.0
  %87 = vmatprep.subr.mxu0 0.0
  %88 = vmatpush2.msra.mxu0 0.0
  %89 = vmatprep.subr.mxu0 0.0
  %90 = vmatpush2.msra.mxu0 0.0
  %91 = vmatprep.subr.mxu0 0.0
  %92 = vmatpush2.msra.mxu0 0.0
  %93 = vmatprep.subr.mxu0 0.0
  %94 = vmatpush2.msra.mxu0 0.0
  %95 = vmatprep.subr.mxu0 0.0
  %96 = vmatpush2.msra.mxu0 0.0
  %97 = vmatprep.subr.mxu0 0.0
  %98 = vmatpush2.msra.mxu0 0.0
  %99 = vmatprep.subr.mxu0 0.0
  %100 = vmatpush2.msra.mxu0 0.0
  %101 = vmatprep.subr.mxu0 0.0
  %102 = vmatpush2.msra.mxu0 0.0
  %103 = vmatprep.subr.mxu0 0.0
  %104 = vmatpush2.msra.mxu0 0.0
  %105 = vmatprep.subr.mxu0 0.0
  %106 = vmatpush2.msra.mxu0 0.0
  %107 = vmatprep.mubr.f32.mxu0 0.0
  %108 = vmatmul.mubr.f32.gmra.mxu0 %v29
  %v109 = vpop.f32.mrf.mxu0
  %v110 = vadd.f32 0.0, %v109
  %v111 = vpop.f32.mrf.mxu0
  %112 = vmatprep.mubr.f32.mxu0 0.0
  %113 = vmatmul.mubr.f32.gmra.mxu0 %v32
  %v114 = vpop.f32.mrf.mxu0
  %v115 = vadd.f32 0.0, %v114
  %v116 = vpop.f32.mrf.mxu0
  %117 = vmatprep.mubr.f32.mxu0 0.0
  %118 = vmatmul.mubr.f32.gmra.mxu0 %v35
  %v119 = vpop.f32.mrf.mxu0
  %v120 = vadd.f32 0.0, %v119
  %v121 = vpop.f32.mrf.mxu0
  %122 = vmatprep.mubr.f32.mxu0 0.0
  %123 = vmatmul.mubr.f32.gmra.mxu0 %v38
  %v124 = vpop.f32.mrf.mxu0
  %v125 = vadd.f32 0.0, %v124
  %v126 = vpop.f32.mrf.mxu0
  %127 = vmatprep.mubr.f32.mxu0 0.0
  %128 = vmatmul.mubr.f32.gmra.mxu0 %v41
  %v129 = vpop.f32.mrf.mxu0
  %v130 = vadd.f32 0.0, %v129
  %v131 = vpop.f32.mrf.mxu0
  %132 = vdwg.mxu0
  %v133 = vmul.f32 %v110, %v110
  %v134 = vmul.f32 %v115, %v115
  %v135 = vmul.f32 %v120, %v120
  %v136 = vmul.f32 %v125, %v125
  %v137 = vmul.f32 %v130, %v130
  %v138 = vld [vmem:[%s2] sm:$0xff]
  %v139 = vld [vmem:[%s2 + $0x8] sm:$0xff]
  %v140 = vld [vmem:[%s2 + $0x10] sm:$0xff]
  %v141 = vld [vmem:[%s2 + $0x18] sm:$0xff]
  %v142 = vld [vmem:[%s2 + $0x20] sm:$0xff]
  %v143 = vld [vmem:[%s2 + $0x28] sm:$0xff]
  %v144 = vld [vmem:[%s2 + $0x30] sm:$0xff]
  %v145 = vld [vmem:[%s2 + $0x38] sm:$0xff]
  %v146 = vld [vmem:[%s2 + $0x40] sm:$0xff]
  %v147 = vld [vmem:[%s2 + $0x48] sm:$0xff]
  %v148 = vld [vmem:[%s2 + $0x50] sm:$0xff]
  %v149 = vld [vmem:[%s2 + $0x58] sm:$0xff]
  %v150 = vld [vmem:[%s2 + $0x60] sm:$0xff]
  %v151 = vld [vmem:[%s2 + $0x68] sm:$0xff]
  %v152 = vld [vmem:[%s2 + $0x70] sm:$0xff]
  %v153 = vld [vmem:[%s2 + $0x78] sm:$0xff]
  %154 = vmatprep.subr.mxu0 0.0
  %155 = vmatpush1.msra.mxu0 %v153
  %156 = vmatprep.subr.mxu0 0.0
  %157 = vmatpush1.msra.mxu0 %v152
  %158 = vmatprep.subr.mxu0 0.0
  %159 = vmatpush1.msra.mxu0 %v151
  %160 = vmatprep.subr.mxu0 0.0
  %161 = vmatpush1.msra.mxu0 %v150
  %162 = vmatprep.subr.mxu0 0.0
  %163 = vmatpush1.msra.mxu0 %v149
  %164 = vmatprep.subr.mxu0 0.0
  %165 = vmatpush1.msra.mxu0 %v148
  %166 = vmatprep.subr.mxu0 0.0
  %167 = vmatpush1.msra.mxu0 %v147
  %168 = vmatprep.subr.mxu0 0.0
  %169 = vmatpush1.msra.mxu0 %v146
  %170 = vmatprep.subr.mxu0 0.0
  %171 = vmatpush1.msra.mxu0 %v145
  %172 = vmatprep.subr.mxu0 0.0
  %173 = vmatpush1.msra.mxu0 %v144
  %174 = vmatprep.subr.mxu0 0.0
  %175 = vmatpush1.msra.mxu0 %v143
  %176 = vmatprep.subr.mxu0 0.0
  %177 = vmatpush1.msra.mxu0 %v142
  %178 = vmatprep.subr.mxu0 0.0
  %179 = vmatpush1.msra.mxu0 %v141
  %180 = vmatprep.subr.mxu0 0.0
  %181 = vmatpush1.msra.mxu0 %v140
  %182 = vmatprep.subr.mxu0 0.0
  %183 = vmatpush1.msra.mxu0 %v139
  %184 = vmatprep.subr.mxu0 0.0
  %185 = vmatpush1.msra.mxu0 %v138
  %186 = vmatprep.subr.mxu0 0.0
  %187 = vmatpush2.msra.mxu0 0.0
  %188 = vmatprep.subr.mxu0 0.0
  %189 = vmatpush2.msra.mxu0 0.0
  %190 = vmatprep.subr.mxu0 0.0
  %191 = vmatpush2.msra.mxu0 0.0
  %192 = vmatprep.subr.mxu0 0.0
  %193 = vmatpush2.msra.mxu0 0.0
  %194 = vmatprep.subr.mxu0 0.0
  %195 = vmatpush2.msra.mxu0 0.0
  %196 = vmatprep.subr.mxu0 0.0
  %197 = vmatpush2.msra.mxu0 0.0
  %198 = vmatprep.subr.mxu0 0.0
  %199 = vmatpush2.msra.mxu0 0.0
  %200 = vmatprep.subr.mxu0 0.0
  %201 = vmatpush2.msra.mxu0 0.0
  %202 = vmatprep.subr.mxu0 0.0
  %203 = vmatpush2.msra.mxu0 0.0
  %204 = vmatprep.subr.mxu0 0.0
  %205 = vmatpush2.msra.mxu0 0.0
  %206 = vmatprep.subr.mxu0 0.0
  %207 = vmatpush2.msra.mxu0 0.0
  %208 = vmatprep.subr.mxu0 0.0
  %209 = vmatpush2.msra.mxu0 0.0
  %210 = vmatprep.subr.mxu0 0.0
  %211 = vmatpush2.msra.mxu0 0.0
  %212 = vmatprep.subr.mxu0 0.0
  %213 = vmatpush2.msra.mxu0 0.0
  %214 = vmatprep.subr.mxu0 0.0
  %215 = vmatpush2.msra.mxu0 0.0
  %216 = vmatprep.subr.mxu0 0.0
  %217 = vmatpush2.msra.mxu0 0.0
  %218 = vmatprep.mubr.f32.mxu0 0.0
  %219 = vmatmul.mubr.f32.gmra.mxu0 %v133
  %v220 = vpop.f32.mrf.mxu0
  %v221 = vadd.f32 0.0, %v220
  %v222 = vpop.f32.mrf.mxu0
  %223 = vmatprep.mubr.f32.mxu0 0.0
  %224 = vmatmul.mubr.f32.gmra.mxu0 %v134
  %v225 = vpop.f32.mrf.mxu0
  %v226 = vadd.f32 0.0, %v225
  %v227 = vpop.f32.mrf.mxu0
  %228 = vmatprep.mubr.f32.mxu0 0.0
  %229 = vmatmul.mubr.f32.gmra.mxu0 %v135
  %v230 = vpop.f32.mrf.mxu0
  %v231 = vadd.f32 0.0, %v230
  %v232 = vpop.f32.mrf.mxu0
  %233 = vmatprep.mubr.f32.mxu0 0.0
  %234 = vmatmul.mubr.f32.gmra.mxu0 %v136
  %v235 = vpop.f32.mrf.mxu0
  %v236 = vadd.f32 0.0, %v235
  %v237 = vpop.f32.mrf.mxu0
  %238 = vmatprep.mubr.f32.mxu0 0.0
  %239 = vmatmul.mubr.f32.gmra.mxu0 %v137
  %v240 = vpop.f32.mrf.mxu0
  %v241 = vadd.f32 0.0, %v240
  %v242 = vpop.f32.mrf.mxu0
  %243 = vdwg.mxu0
  %v244 = vlog2.pop %v221
  %v245 = vmul.f32 %v244, 0.6931472
  %v246 = vlog2.pop %v226
  %v247 = vmul.f32 %v246, 0.6931472
  %v248 = vlog2.pop %v231
  %v249 = vmul.f32 %v248, 0.6931472
  %v250 = vlog2.pop %v236
  %v251 = vmul.f32 %v250, 0.6931472
  %v252 = vlog2.pop %v241
  %v253 = vmul.f32 %v252, 0.6931472
  %v254 = vrcp.pop 0.6931472
  %v255 = vmul.f32 %v245, %v254
  %v256 = vmul.f32 %v247, %v254
  %v257 = vmul.f32 %v249, %v254
  %v258 = vmul.f32 %v251, %v254
  %v259 = vmul.f32 %v253, %v254
  %260 = vst [vmem:[%s3] sm:$0xff] %v255
  %261 = vst [vmem:[%s3 + $0x8] sm:$0xff] %v256
  %262 = vst [vmem:[%s3 + $0x10] sm:$0xff] %v257
  %263 = vst [vmem:[%s3 + $0x18] sm:$0xff] %v258
  %264 = vst [vmem:[%s3 + $0x20] sm:$0xff] %v259
  // Predicated region
  $region14: #{wav_to_mel.1} parent=0 // pred_check
    _
  $region15: #{wav_to_mel.1} parent=0 // pred_check_branch
    %266 = sbr.rel (0) target = $region17
  $region16: #{wav_to_mel.1} parent=0 // pred_region
    _
  $region17: #{wav_to_mel.1} parent=0 // pred_fallthru
    _
  // Predicated region
  $region18: #{wav_to_mel.1} parent=0 // pred_check
    _
  $region19: #{wav_to_mel.1} parent=0 // pred_check_branch
    %268 = sbr.rel (0) target = $region21
  $region20: #{wav_to_mel.1} parent=0 // pred_region
    _
  $region21: #{wav_to_mel.1} parent=0 // pred_fallthru
    _

</llo_original>
